<compile_context>
chip_gen: v6e
topology: v6e:2x2x1
jax: 0.10.0
libtpu: 0.0.40
codegen_flags: <defaults>
</compile_context>

<pallas_src>
import functools

import numpy as np
import jax
import jax.numpy as jnp
from jax.experimental import pallas as pl
from jax.experimental.pallas import tpu as pltpu


# ----------------------------------------------------------------------------
# tiling helpers
# ----------------------------------------------------------------------------
def _round_up(x, m):
    return (x + m - 1) // m * m


def _pick_m(m):
    """(padded M, M block).  Small M -> one full block rounded to 8; else 512 tiles."""
    if m <= 512:
        mp = _round_up(m, 8)
        return mp, mp
    return _round_up(m, 512), 512


def _pick_n(n):
    """(N, N block).  Keep the lane dim a large multiple of 128 when possible."""
    if n % 256 == 0:
        return n, 256
    if n % 128 == 0:
        return n, 128
    return n, n  # 64 / 100 / 1 -> single full-dim block


# ----------------------------------------------------------------------------
# Pallas kernels
# ----------------------------------------------------------------------------
def _mm_kernel(x_ref, w_ref, b_ref, *refs, relu, has_res):
    """o = [relu]( x @ w + b [+ res] ); bf16 in, f32 MXU accumulation."""
    if has_res:
        r_ref, o_ref = refs
    else:
        (o_ref,) = refs
    acc = jnp.dot(x_ref[...], w_ref[...], preferred_element_type=jnp.float32)
    acc = acc + b_ref[...]
    if has_res:
        acc = acc + r_ref[...].astype(jnp.float32)
    if relu:
        acc = jnp.maximum(acc, 0.0)
    o_ref[...] = acc.astype(o_ref.dtype)


def _conv3x3_kernel(x_ref, w_ref, b_ref, o_ref, acc_ref, *, offsets, hwp, relu):
    """Stride-1 3x3 conv on one image: the 9 taps are 9 statically-offset row
    slices of the flattened padded image, each fed to the MXU and accumulated
    in an f32 VMEM scratch.  No im2col tensor ever touches HBM."""
    acc_ref[...] = jnp.zeros_like(acc_ref)
    for t, off in enumerate(offsets):
        acc_ref[...] += jnp.dot(x_ref[0, off:off + hwp, :], w_ref[t],
                                preferred_element_type=jnp.float32)
    out = acc_ref[...] + b_ref[...]
    if relu:
        out = jnp.maximum(out, 0.0)
    o_ref[0] = out.astype(o_ref.dtype)


def _maxpool_kernel(x_ref, o_ref):
    # x_ref: (9, MB, C) -- the nine 3x3 window taps for a tile of output pixels
    o_ref[...] = jnp.max(x_ref[...], axis=0).astype(o_ref.dtype)


def _head_kernel(x_ref, w1_ref, b1_ref, w2_ref, b2_ref, o_ref):
    """Fused classifier tail: global avg-pool -> fc(2048,100) -> ReLU -> Linear(100,1)."""
    pooled = jnp.mean(x_ref[...].astype(jnp.float32), axis=1)          # (Np, C)
    h = jnp.dot(pooled.astype(jnp.bfloat16), w1_ref[...],
                preferred_element_type=jnp.float32) + b1_ref[...]       # (Np, 100)
    h = jnp.maximum(h, 0.0)
    out = jnp.dot(h.astype(jnp.bfloat16), w2_ref[...],
                  preferred_element_type=jnp.float32) + b2_ref[...]     # (Np, 1)
    o_ref[...] = out


# ----------------------------------------------------------------------------
# Pallas wrappers
# ----------------------------------------------------------------------------
def _fused_matmul(x, w, bias, res=None, *, relu=False, out_dtype=jnp.bfloat16):
    """x:(M,K)bf16 @ w:(K,N)bf16 + bias:(1,N)f32 [+ res:(M,N)bf16] -> (M,N)."""
    m, k = x.shape
    n = w.shape[1]
    mp, mb = _pick_m(m)
    n_, nb = _pick_n(n)          # n_ == n (never padded)
    if mp != m:
        x = jnp.pad(x, ((0, mp - m), (0, 0)))
        if res is not None:
            res = jnp.pad(res, ((0, mp - m), (0, 0)))
    # single full-K block (max K in the net is 4608 bf16) -> no K grid, no scratch
    in_specs = [
        pl.BlockSpec((mb, k), lambda i, j: (i, 0)),
        pl.BlockSpec((k, nb), lambda i, j: (0, j)),
        pl.BlockSpec((1, nb), lambda i, j: (0, j)),
    ]
    args = [x, w, bias]
    if res is not None:
        in_specs.append(pl.BlockSpec((mb, nb), lambda i, j: (i, j)))
        args.append(res)
    out = pl.pallas_call(
        functools.partial(_mm_kernel, relu=relu, has_res=res is not None),
        out_shape=jax.ShapeDtypeStruct((mp, n_), out_dtype),
        grid_spec=pltpu.PrefetchScalarGridSpec(
            num_scalar_prefetch=0,
            grid=(mp // mb, n_ // nb),
            in_specs=in_specs,
            out_specs=pl.BlockSpec((mb, nb), lambda i, j: (i, j)),
        ),
        compiler_params=pltpu.CompilerParams(
            dimension_semantics=("parallel", "parallel")),
    )(*args)
    return out[:m] if mp != m else out


@functools.partial(jax.jit, static_argnames=("kh", "kw", "stride", "padding", "relu"))
def conv_generic(x, w, bias, *, kh, kw, stride, padding, relu):
    """1x1 convs and the few strided convs: gather/im2col (JAX glue) + fused matmul."""
    n, h, wd, c = x.shape
    kk, cin, cout = w.shape
    if padding > 0:
        x = jnp.pad(x, ((0, 0), (padding, padding), (padding, padding), (0, 0)))
    hp, wp = h + 2 * padding, wd + 2 * padding
    oh = (hp - kh) // stride + 1
    ow = (wp - kw) // stride + 1
    if kh == 1 and kw == 1:
        patches = x[:, ::stride, ::stride, :] if stride > 1 else x
    else:
        # TODO(synk): im2col gather kept as JAX glue only for the 4 strided convs
        # (7x7 stem + three stride-2 3x3s); all stride-1 3x3 convs avoid it entirely.
        cols = [x[:, dy:dy + stride * oh:stride, dx:dx + stride * ow:stride, :]
                for dy in range(kh) for dx in range(kw)]
        patches = jnp.concatenate(cols, axis=-1)
    out = _fused_matmul(patches.reshape(n * oh * ow, kk * cin),
                        w.reshape(kk * cin, cout), bias, relu=relu)
    return out.reshape(n, oh, ow, cout)


@functools.partial(jax.jit, static_argnames=("relu",))
def conv3x3_s1(x, w, bias, *, relu):
    """3x3 / stride-1 / pad-1 conv with no materialized im2col."""
    n, h, wd, cin = x.shape
    cout = w.shape[2]
    wp = wd + 2
    flat_len = (h + 3) * wp          # rows padded (1, 2), cols padded (1, 1)
    hwp = h * wp
    xf = jnp.pad(x, ((0, 0), (1, 2), (1, 1), (0, 0))).reshape(n, flat_len, cin)
    n_, nb = _pick_n(cout)
    offsets = tuple(dy * wp + dx for dy in range(3) for dx in range(3))
    out = pl.pallas_call(
        functools.partial(_conv3x3_kernel, offsets=offsets, hwp=hwp, relu=relu),
        out_shape=jax.ShapeDtypeStruct((n, hwp, cout), x.dtype),
        grid_spec=pltpu.PrefetchScalarGridSpec(
            num_scalar_prefetch=0,
            grid=(n, n_ // nb),
            in_specs=[
                pl.BlockSpec((1, flat_len, cin), lambda ni, j: (ni, 0, 0)),
                pl.BlockSpec((9, cin, nb), lambda ni, j: (0, 0, j)),
                pl.BlockSpec((1, nb), lambda ni, j: (0, j)),
            ],
            out_specs=pl.BlockSpec((1, hwp, nb), lambda ni, j: (ni, 0, j)),
            scratch_shapes=[pltpu.VMEM((hwp, nb), jnp.float32)],
        ),
        compiler_params=pltpu.CompilerParams(
            dimension_semantics=("parallel", "parallel")),
    )(xf, w, bias)
    # drop the 2 width-padding columns kept in the flat row layout
    return out.reshape(n, h, wp, cout)[:, :, :wd, :]


@jax.jit
def conv1x1_residual(x, w, bias, identity):
    """Fused bottleneck tail: relu(x @ w + bias + identity)  (conv3 + skip + ReLU)."""
    n, h, wd, cin = x.shape
    cout = w.shape[2]
    out = _fused_matmul(x.reshape(n * h * wd, cin), w.reshape(cin, cout), bias,
                        res=identity.reshape(n * h * wd, cout), relu=True)
    return out.reshape(n, h, wd, cout)


@jax.jit
def maxpool_3x3_s2(x):
    n, h, wd, c = x.shape
    xp = jnp.pad(x, ((0, 0), (1, 1), (1, 1), (0, 0)), constant_values=-jnp.inf)
    oh = (h + 2 - 3) // 2 + 1
    ow = (wd + 2 - 3) // 2 + 1
    # TODO(synk): the 9 window taps are still gathered with JAX strided slices (runs
    # once, on the 64-channel stem output); the reduction itself is a tiled Pallas kernel.
    taps = [xp[:, dy:dy + 2 * oh:2, dx:dx + 2 * ow:2, :]
            for dy in range(3) for dx in range(3)]
    m = n * oh * ow
    stacked = jnp.stack(taps, axis=0).reshape(9, m, c)
    mp, mb = _pick_m(m)
    if mp != m:
        stacked = jnp.pad(stacked, ((0, 0), (0, mp - m), (0, 0)))
    out = pl.pallas_call(
        _maxpool_kernel,
        out_shape=jax.ShapeDtypeStruct((mp, c), x.dtype),
        grid_spec=pltpu.PrefetchScalarGridSpec(
            num_scalar_prefetch=0,
            grid=(mp // mb,),
            in_specs=[pl.BlockSpec((9, mb, c), lambda i: (0, i, 0))],
            out_specs=pl.BlockSpec((mb, c), lambda i: (i, 0)),
        ),
        compiler_params=pltpu.CompilerParams(dimension_semantics=("parallel",)),
    )(stacked)
    if mp != m:
        out = out[:m]
    return out.reshape(n, oh, ow, c)


@jax.jit
def fused_head(x, w_fc, b_fc, w_ext, b_ext):
    """Global avg-pool + fc(2048->100) + ReLU + ext Linear(100->1) in one kernel."""
    n, h, wd, c = x.shape
    np_ = _round_up(n, 8)
    xf = x.reshape(n, h * wd, c)
    if np_ != n:
        xf = jnp.pad(xf, ((0, np_ - n), (0, 0), (0, 0)))
    out = pl.pallas_call(
        _head_kernel,
        out_shape=jax.ShapeDtypeStruct((np_, 1), jnp.float32),
    )(xf, w_fc, b_fc, w_ext, b_ext)
    return out[:n]


# ----------------------------------------------------------------------------
# Deterministic synthetic parameters (ResNet-152 architecture)
# ----------------------------------------------------------------------------
def init_conv(key, in_c, out_c, kh, kw):
    k1, k2, k3 = jax.random.split(key, 3)
    fan_in = in_c * kh * kw
    w = (jax.random.normal(k1, (kh * kw, in_c, out_c), jnp.float32)
         * np.sqrt(2.0 / fan_in))
    # folded (inference-mode) BatchNorm: gamma/sqrt(var+eps) is folded straight into
    # the conv weight, the remaining per-channel shift stays as the epilogue bias.
    scale = 1.0 + 0.05 * jax.random.normal(k2, (1, 1, out_c), jnp.float32)
    bias = 0.05 * jax.random.normal(k3, (1, out_c), jnp.float32)
    return {"w": (w * scale).astype(jnp.bfloat16), "b": bias}


def init_linear(key, in_f, out_f):
    kw_, kb_ = jax.random.split(key)
    w = jax.random.normal(kw_, (in_f, out_f), jnp.float32) / np.sqrt(in_f)
    b = 0.01 * jax.random.normal(kb_, (1, out_f), jnp.float32)
    return {"w": w.astype(jnp.bfloat16), "b": b}


def init_bottleneck(key, in_c, mid_c, stride):
    keys = jax.random.split(key, 4)
    p = {"conv1": init_conv(keys[0], in_c, mid_c, 1, 1),
         "conv2": init_conv(keys[1], mid_c, mid_c, 3, 3),
         "conv3": init_conv(keys[2], mid_c, 4 * mid_c, 1, 1),
         "stride": stride}
    if stride != 1 or in_c != 4 * mid_c:
        p["down"] = init_conv(keys[3], in_c, 4 * mid_c, 1, 1)
    return p


def init_resnet152(key):
    cfg = [(64, 3, 1), (128, 8, 2), (256, 36, 2), (512, 3, 2)]  # ResNet-152
    keys = jax.random.split(key, 7)
    params = {"conv1": init_conv(keys[0], 3, 64, 7, 7)}
    in_c = 64
    layers = []
    for li, (mid, n_blocks, stride) in enumerate(cfg):
        lkeys = jax.random.split(keys[1 + li], n_blocks)
        blocks = []
        for bi in range(n_blocks):
            s = stride if bi == 0 else 1
            blocks.append(init_bottleneck(lkeys[bi], in_c, mid, s))
            in_c = 4 * mid
        layers.append(blocks)
    params["layers"] = layers
    params["fc"] = init_linear(keys[5], 2048, 100)   # backbone head (see TODO above)
    params["ext_fc"] = init_linear(keys[6], 100, 1)  # self.ext = ReLU() -> Linear(100,1)
    return params


# ----------------------------------------------------------------------------
# Forward pass
# ----------------------------------------------------------------------------
def bottleneck_forward(x, bp):
    stride = bp["stride"]
    c1, c2, c3 = bp["conv1"], bp["conv2"], bp["conv3"]
    out = conv_generic(x, c1["w"], c1["b"], kh=1, kw=1, stride=1, padding=0, relu=True)
    if stride == 1:
        out = conv3x3_s1(out, c2["w"], c2["b"], relu=True)
    else:
        out = conv_generic(out, c2["w"], c2["b"], kh=3, kw=3, stride=stride,
                           padding=1, relu=True)
    if "down" in bp:
        d = bp["down"]
        identity = conv_generic(x, d["w"], d["b"], kh=1, kw=1, stride=stride,
                                padding=0, relu=False)
    else:
        identity = x
    # conv3 + residual add + ReLU fused in one matmul epilogue
    return conv1x1_residual(out, c3["w"], c3["b"], identity)


def resnet152_forward(images_nchw, params):
    # PyTorch NCHW -> NHWC, activations carried in bf16
    x = jnp.transpose(images_nchw, (0, 2, 3, 1)).astype(jnp.bfloat16)
    c1 = params["conv1"]
    x = conv_generic(x, c1["w"], c1["b"], kh=7, kw=7, stride=2, padding=3, relu=True)
    x = maxpool_3x3_s2(x)
    for blocks in params["layers"]:
        for bp in blocks:
            x = bottleneck_forward(x, bp)
    # avgpool -> fc(2048,100) -> ReLU -> Linear(100,1), all in one Pallas kernel
    out = fused_head(x, params["fc"]["w"], params["fc"]["b"],
                     params["ext_fc"]["w"], params["ext_fc"]["b"])
    return out


if __name__ == "__main__":
    key = jax.random.PRNGKey(0)
    pkey, xkey = jax.random.split(key)
    params = init_resnet152(pkey)
    # small but architecture-consistent input: batch=2, 3 channels, 64x64 spatial (NCHW)
    images = jax.random.normal(xkey, (2, 3, 64, 64), jnp.float32)
    out = resnet152_forward(images, params)
    out = jax.block_until_ready(out)
    assert out.shape == (2, 1), out.shape
    print("KERNEL_OK")
</pallas_src>

<mosaic_0001>
module attributes {stable_mosaic.version = 11 : i64} {
  func.func @_mm_kernel(%arg0: i32, %arg1: i32, %arg2: memref<512x147xbf16, #tpu.memory_space<vmem>>, %arg3: memref<147x64xbf16, #tpu.memory_space<vmem>>, %arg4: memref<1x64xf32, #tpu.memory_space<vmem>>, %arg5: memref<512x64xbf16, #tpu.memory_space<vmem>>) attributes {dimension_semantics = [#tpu.dimension_semantics<parallel>, #tpu.dimension_semantics<parallel>], iteration_bounds = array<i64: 4, 1>, scalar_prefetch = 0 : i64, scratch_operands = 0 : i64, tpu.core_type = #tpu.core_type<tc>, window_params = [{transform_indices = @transform_0, window_bounds = array<i64: 512, 147>}, {transform_indices = @transform_1, window_bounds = array<i64: 147, 64>}, {transform_indices = @transform_2, window_bounds = array<i64: 1, 64>}, {transform_indices = @transform_3, window_bounds = array<i64: 512, 64>}]} {
    %c0 = arith.constant 0 : index
    %c0_0 = arith.constant 0 : index
    %0 = vector.load %arg2[%c0, %c0_0] : memref<512x147xbf16, #tpu.memory_space<vmem>>, vector<512x147xbf16>
    %c0_1 = arith.constant 0 : index
    %c0_2 = arith.constant 0 : index
    %1 = vector.load %arg3[%c0_1, %c0_2] : memref<147x64xbf16, #tpu.memory_space<vmem>>, vector<147x64xbf16>
    %cst = arith.constant dense<0.000000e+00> : vector<512x64xf32>
    %2 = tpu.matmul %0, %1, %cst {dimension_numbers = #tpu.dot_dimension_numbers<[1], [0], [0], [1], [0, 0, 1, 1], [], []>} : vector<512x147xbf16>, vector<147x64xbf16>, vector<512x64xf32> -> vector<512x64xf32>
    %c0_3 = arith.constant 0 : index
    %c0_4 = arith.constant 0 : index
    %3 = vector.load %arg4[%c0_3, %c0_4] : memref<1x64xf32, #tpu.memory_space<vmem>>, vector<1x64xf32>
    %4 = vector.broadcast %3 : vector<1x64xf32> to vector<512x64xf32>
    %5 = arith.addf %2, %4 : vector<512x64xf32>
    %cst_5 = arith.constant 0.000000e+00 : f32
    %6 = vector.broadcast %cst_5 : f32 to vector<512x64xf32>
    %7 = arith.maximumf %5, %6 : vector<512x64xf32>
    %8 = arith.truncf %7 : vector<512x64xf32> to vector<512x64xbf16>
    %c0_6 = arith.constant 0 : index
    %c0_7 = arith.constant 0 : index
    %9 = vector.load %arg5[%c0_6, %c0_7] : memref<512x64xbf16, #tpu.memory_space<vmem>>, vector<512x64xbf16>
    tpu.vector_store %arg5[%c0_6, %c0_7], %8 {strides = array<i32>} : memref<512x64xbf16, #tpu.memory_space<vmem>>, vector<512x64xbf16>,
    return
  }
  func.func @transform_0(%arg0: i32, %arg1: i32) -> (i32, i32) {
    %c0_i32 = arith.constant 0 : i32
    %c0_i32_0 = arith.constant 0 : i32
    return %arg0, %c0_i32 : i32, i32
  }
  func.func @transform_1(%arg0: i32, %arg1: i32) -> (i32, i32) {
    %c0_i32 = arith.constant 0 : i32
    %c0_i32_0 = arith.constant 0 : i32
    return %c0_i32, %arg1 : i32, i32
  }
  func.func @transform_2(%arg0: i32, %arg1: i32) -> (i32, i32) {
    %c0_i32 = arith.constant 0 : i32
    %c0_i32_0 = arith.constant 0 : i32
    return %c0_i32, %arg1 : i32, i32
  }
  func.func @transform_3(%arg0: i32, %arg1: i32) -> (i32, i32) {
    %c0_i32 = arith.constant 0 : i32
    return %arg0, %arg1 : i32, i32
  }
}

</mosaic_0001>

<llo_original>
// kernel: conv_generic.1
$region0: #{conv_generic.1}
  #allocation0 [shape = 'u32[]', space=smem, size = 0x4, offset = 0x4, fixed_abs, tag = 'smem constant byte address 0x4 - core index']
  #allocation1 [shape = 'u32[144,128]{1,0:T(1,128)}', space=vmem, size = 0x12000, scoped, tag = 'internal scratch']
  %s0 = inlined_call_operand.vmem [shape: bf16[2048,147], index: 0, kind: input, shape index: {}]
  %s1 = inlined_call_operand.vmem [shape: bf16[147,64], index: 1, kind: input, shape index: {}]
  %s2 = inlined_call_operand.vmem [shape: f32[1,64], index: 2, kind: input, shape index: {}]
  %s3 = inlined_call_operand.hbm [shape: bf16[2048,64], index: 3, kind: output, shape index: {}]
  %s4 = sld [smem:[#allocation0]]
  $region45: #{conv_generic.1} parent=0
    _
  %s6 = ssub.s32 1, %s4
  %s7 = scalar_select 0, %s6, %s4
  $region1: #{conv_generic.1} parent=0
    #allocation2 [shape = 'u8[262144]{0}', space=vmem, size = 0x40000, scoped, tag = 'output window, operand 0']
    #allocation3 [shape = 's32[2]{0}', space=sflag, size = 0x8, scoped, tag = 'scoped memory for conv_generic.1']
    %8 = vsyncpa [#allocation3], 0
    %s9 = scalar_lea.sflag [#allocation3], 1
    %10 = vsyncpa %s9, 0
    loop: start=0, step=1, limit=6
    $region2: #{conv_generic.1} parent=1 // loop_pre_header
      _
    $region3: #{conv_generic.1} parent=1 // loop_header
      %s12 = sphi 0, %s16
      %p13 = scmp.ge.s32.totalorder %s12, 6
      %s19 = sphi 0, %s31
      %s20 = sphi 0, %s27
      %s21 = sphi 0, %s19
      %s22 = sphi 0, %s20
      %s23 = sphi 0, %s21
      %s24 = sphi 0, %s22
      %s34 = sphi 0, %s36
      %s37 = sphi 0, %s34
      %s38 = sphi 0, %s37
      %s54 = sphi 0, %s38
      %s60 = sphi 0, %s62
      %s63 = sphi 0, %s60
      %s64 = sphi 0, %s63
      %s80 = sphi 0, %s64
      %s86 = sphi 0, %s88
      %s89 = sphi 0, %s86
      %s90 = sphi 0, %s89
      %s106 = sphi 0, %s90
      %s114 = sphi 0, %s116
      %s117 = sphi 0, %s114
      %s118 = sphi 0, %s117
      %s134 = sphi 0, %s118
    $region4: #{conv_generic.1} parent=1 // loop_header_branch
      %15 = sbr.rel (%p13) target = $region8
    $region5: #{conv_generic.1} parent=1 // loop_body
      %s17 = ssub.s32 %s12, 1
      %s18 = ssub.s32 %s12, 2
      %s25 = sadd.s32 1, %s20
      %p26 = scmp.ge.s32.totalorder %s25, 1
      %s27 = scalar_select %p26, 0, %s25
      %s28 = sadd.s32 1, %s19
      %s29 = scalar_select %p26, %s28, %s19
      %p30 = scmp.ge.s32.totalorder %s29, 4
      %s31 = scalar_select %p30, 0, %s29
      %s32 = ssub.s32 %s19, %s31
      %p33 = scmp.eq.s32.totalorder %s32, 0
      %s35 = sadd.s32 %s34, 1
      %s36 = scalar_select %p33, %s34, %s35
      %p39 = pneg %p33
      %p40 = scmp.eq.s32.totalorder %s12, 3
      %p41 = por %p39, %p40
      %p42 = scmp.ne.s32.totalorder %s34, %s37
      %p43 = scmp.eq.s32.totalorder %s12, 0
      %p44 = por %p42, %p43
      %p45 = scmp.ne.s32.totalorder %s34, %s37
      %p46 = scmp.eq.s32.totalorder %s17, 3
      %p47 = por %p45, %p46
      %p48 = scmp.ne.s32.totalorder %s37, %s38
      %p49 = scmp.eq.s32.totalorder %s17, 0
      %p50 = por %p48, %p49
      %p51 = scmp.ne.s32.totalorder %s37, %s38
      %p52 = scmp.eq.s32.totalorder %s18, 3
      %p53 = por %p51, %p52
      %p55 = scmp.ne.s32.totalorder %s38, %s54
      %p56 = scmp.eq.s32.totalorder %s18, 0
      %p57 = por %p55, %p56
      %s58 = ssub.s32 %s20, %s27
      %p59 = scmp.eq.s32.totalorder %s58, 0
      %s61 = sadd.s32 %s60, 1
      %s62 = scalar_select %p59, %s60, %s61
      %p65 = pneg %p59
      %p66 = scmp.eq.s32.totalorder %s12, 3
      %p67 = por %p65, %p66
      %p68 = scmp.ne.s32.totalorder %s60, %s63
      %p69 = scmp.eq.s32.totalorder %s12, 0
      %p70 = por %p68, %p69
      %p71 = scmp.ne.s32.totalorder %s60, %s63
      %p72 = scmp.eq.s32.totalorder %s17, 3
      %p73 = por %p71, %p72
      %p74 = scmp.ne.s32.totalorder %s63, %s64
      %p75 = scmp.eq.s32.totalorder %s17, 0
      %p76 = por %p74, %p75
      %p77 = scmp.ne.s32.totalorder %s63, %s64
      %p78 = scmp.eq.s32.totalorder %s18, 3
      %p79 = por %p77, %p78
      %p81 = scmp.ne.s32.totalorder %s64, %s80
      %p82 = scmp.eq.s32.totalorder %s18, 0
      %p83 = por %p81, %p82
      %s84 = ssub.s32 %s20, %s27
      %p85 = scmp.eq.s32.totalorder %s84, 0
      %s87 = sadd.s32 %s86, 1
      %s88 = scalar_select %p85, %s86, %s87
      %p91 = pneg %p85
      %p92 = scmp.eq.s32.totalorder %s12, 3
      %p93 = por %p91, %p92
      %p94 = scmp.ne.s32.totalorder %s86, %s89
      %p95 = scmp.eq.s32.totalorder %s12, 0
      %p96 = por %p94, %p95
      %p97 = scmp.ne.s32.totalorder %s86, %s89
      %p98 = scmp.eq.s32.totalorder %s17, 3
      %p99 = por %p97, %p98
      %p100 = scmp.ne.s32.totalorder %s89, %s90
      %p101 = scmp.eq.s32.totalorder %s17, 0
      %p102 = por %p100, %p101
      %p103 = scmp.ne.s32.totalorder %s89, %s90
      %p104 = scmp.eq.s32.totalorder %s18, 3
      %p105 = por %p103, %p104
      %p107 = scmp.ne.s32.totalorder %s90, %s106
      %p108 = scmp.eq.s32.totalorder %s18, 0
      %p109 = por %p107, %p108
      %s110 = ssub.s32 %s19, %s31
      %s111 = ssub.s32 %s20, %s27
      %s112 = sor.u32 %s110, %s111
      %p113 = scmp.eq.s32.totalorder %s112, 0
      %s115 = sadd.s32 %s114, 1
      %s116 = scalar_select %p113, %s114, %s115
      %p119 = pneg %p113
      %p120 = scmp.eq.s32.totalorder %s12, 3
      %p121 = por %p119, %p120
      %p122 = scmp.ne.s32.totalorder %s114, %s117
      %p123 = scmp.eq.s32.totalorder %s12, 0
      %p124 = por %p122, %p123
      %p125 = scmp.ne.s32.totalorder %s114, %s117
      %p126 = scmp.eq.s32.totalorder %s17, 3
      %p127 = por %p125, %p126
      %p128 = scmp.ne.s32.totalorder %s117, %s118
      %p129 = scmp.eq.s32.totalorder %s17, 0
      %p130 = por %p128, %p129
      %p131 = scmp.ne.s32.totalorder %s117, %s118
      %p132 = scmp.eq.s32.totalorder %s18, 3
      %p133 = por %p131, %p132
      %p135 = scmp.ne.s32.totalorder %s118, %s134
      %p136 = scmp.eq.s32.totalorder %s18, 0
      %p137 = por %p135, %p136
      %p138 = scmp.le.s32.totalorder 1, %s12
      %p139 = scmp.lt.s32.totalorder %s12, 5
      %p140 = pnand %p138, %p139
      %p141 = pneg %p140
      // Predicated region
      $region9: #{conv_generic.1} parent=5 // pred_check
        _
      $region10: #{conv_generic.1} parent=5 // pred_check_branch
        %143 = sbr.rel (%p140) target = $region12
      $region11: #{conv_generic.1} parent=5 // pred_region
        %s144 = ssub.s32 %s12, 1
        // Predicated region
        $region13: #{conv_generic.1} parent=11 // pred_check
          %p145 = pneg %p76
        $region14: #{conv_generic.1} parent=11 // pred_check_branch
          %147 = sbr.rel (%p145) target = $region16
        $region15: #{conv_generic.1} parent=11 // pred_region
          %p148 = scmp.lt.s32.totalorder %s22, 0
          %s149 = scalar_select %p148, %s22, 0
          %s150 = smul.addr %s149, 4
          %s151 = scalar_lea.vmem %s1, %s150
        $region16: #{conv_generic.1} parent=11 // pred_fallthru
          _
        // Predicated region
        $region17: #{conv_generic.1} parent=11 // pred_check
          %p152 = pneg %p102
        $region18: #{conv_generic.1} parent=11 // pred_check_branch
          %154 = sbr.rel (%p152) target = $region20
        $region19: #{conv_generic.1} parent=11 // pred_region
          %p155 = scmp.lt.s32.totalorder %s22, 0
          %s156 = scalar_select %p155, %s22, 0
          %s157 = scalar_lea.vmem %s2, %s156
        $region20: #{conv_generic.1} parent=11 // pred_fallthru
          _
      $region12: #{conv_generic.1} parent=5 // pred_fallthru
        _
      %p158 = scmp.lt.s32.totalorder %s12, 4
      // Predicated region
      $region21: #{conv_generic.1} parent=5 // pred_check
        %p159 = pneg %p158
      $region22: #{conv_generic.1} parent=5 // pred_check_branch
        %161 = sbr.rel (%p159) target = $region24
      $region23: #{conv_generic.1} parent=5 // pred_region
        // Predicated region
        $region25: #{conv_generic.1} parent=23 // pred_check
          %p162 = pneg %p44
        $region26: #{conv_generic.1} parent=23 // pred_check_branch
          %164 = sbr.rel (%p162) target = $region28
        $region27: #{conv_generic.1} parent=23 // pred_region
          %s165 = smul.u32 64, %s19
          %p166 = scmp.lt.s32.totalorder %s165, 255
          %s167 = scalar_select %p166, %s165, 255
          %s168 = smul.addr %s167, 2
          %s169 = smul.addr %s168, 4
          %s170 = scalar_lea.vmem %s0, %s169
          %s171 = smul.u32 64, %s19
        $region28: #{conv_generic.1} parent=23 // pred_fallthru
          _
      $region24: #{conv_generic.1} parent=5 // pred_fallthru
        _
      %p172 = scmp.le.s32.totalorder 1, %s12
      %p173 = scmp.lt.s32.totalorder %s12, 5
      %p174 = pnand %p172, %p173
      %p175 = pneg %p174
      // Predicated region
      $region29: #{conv_generic.1} parent=5 // pred_check
        _
      $region30: #{conv_generic.1} parent=5 // pred_check_branch
        %177 = sbr.rel (%p174) target = $region32
      $region31: #{conv_generic.1} parent=5 // pred_region
        %s178 = ssub.s32 %s12, 1
        %s179 = smul.u32 64, %s21
        %p180 = scmp.lt.s32.totalorder %s179, 255
        %s181 = scalar_select %p180, %s179, 255
        %s182 = smul.addr %s181, 2
        %s183 = smul.addr %s182, 4
        %s184 = scalar_lea.vmem %s0, %s183
        %p185 = pneg %p50
        %p186 = pneg %p47
        %p187 = scmp.lt.s32.totalorder %s22, 0
        %s188 = scalar_select %p187, %s22, 0
        %s189 = smul.addr %s188, 4
        %s190 = scalar_lea.vmem %s1, %s189
        %p191 = pneg %p76
        %p192 = pneg %p73
        %p193 = scmp.lt.s32.totalorder %s22, 0
        %s194 = scalar_select %p193, %s22, 0
        %s195 = scalar_lea.vmem %s2, %s194
        %p196 = pneg %p102
        %p197 = pneg %p99
        %p198 = pneg %p130
        %p199 = pneg %p127
        %s200 = sand.u32 %s117, 1
        %s201 = scalar_lea.sflag [#allocation3], %s200
        %s202 = sand.u32 %s117, 1
        %s203 = smul.addr %s202, 256
        %s204 = scalar_lea.vmem [#allocation2], %s203
        %s205 = smul.u32 64, %s21
        %p206 = scmp.lt.s32.totalorder %s205, 255
        %s207 = scalar_select %p206, %s205, 255
        %s208 = smul.addr %s207, 2
        %s209 = smul.addr %s208, 4
        %s210 = scalar_lea.vmem %s0, %s209
        %s211 = smul.u32 64, %s21
        %p212 = scmp.lt.s32.totalorder %s22, 0
        %s213 = scalar_select %p212, %s22, 0
        %s214 = smul.addr %s213, 4
        %s215 = scalar_lea.vmem %s1, %s214
        %p216 = scmp.lt.s32.totalorder %s22, 0
        %s217 = scalar_select %p216, %s22, 0
        %s218 = scalar_lea.vmem %s2, %s217
        %s219 = smul.u32 64, %s21
        %v221 = vld [vmem:[%s210] sm:$0xff]
        %v222 = vld [vmem:[%s210 + $0x8] sm:$0xff]
        %v223 = vld [vmem:[%s210 + $0x10] sm:$0xff]
        %v224 = vld [vmem:[%s210 + $0x18] sm:$0xff]
        %v225 = vld [vmem:[%s210 + $0x20] sm:$0xff]
        %v226 = vld [vmem:[%s210 + $0x28] sm:$0xff]
        %v227 = vld [vmem:[%s210 + $0x30] sm:$0xff]
        %v228 = vld [vmem:[%s210 + $0x38] sm:$0xff]
        %v229 = vld [vmem:[%s210 + $0x40] sm:$0xff]
        %v230 = vld [vmem:[%s210 + $0x48] sm:$0xff]
        %v231 = vld [vmem:[%s210 + $0x50] sm:$0xff]
        %v232 = vld [vmem:[%s210 + $0x58] sm:$0xff]
        %v233 = vld [vmem:[%s210 + $0x60] sm:$0xff]
        %v234 = vld [vmem:[%s210 + $0x68] sm:$0xff]
        %v235 = vld [vmem:[%s210 + $0x70] sm:$0xff]
        %v236 = vld [vmem:[%s210 + $0x78] sm:$0xff]
        %v237 = vld [vmem:[%s210 + $0x80] sm:$0xff]
        %v238 = vld [vmem:[%s210 + $0x88] sm:$0xff]
        %v239 = vld [vmem:[%s210 + $0x90] sm:$0xff]
        %v240 = vld [vmem:[%s210 + $0x98] sm:$0xff]
        %v241 = vld [vmem:[%s210 + $0xa0] sm:$0xff]
        %v242 = vld [vmem:[%s210 + $0xa8] sm:$0xff]
        %v243 = vld [vmem:[%s210 + $0xb0] sm:$0xff]
        %v244 = vld [vmem:[%s210 + $0xb8] sm:$0xff]
        %v245 = vld [vmem:[%s210 + $0xc0] sm:$0xff]
        %v246 = vld [vmem:[%s210 + $0xc8] sm:$0xff]
        %v247 = vld [vmem:[%s210 + $0xd0] sm:$0xff]
        %v248 = vld [vmem:[%s210 + $0xd8] sm:$0xff]
        %v249 = vld [vmem:[%s210 + $0xe0] sm:$0xff]
        %v250 = vld [vmem:[%s210 + $0xe8] sm:$0xff]
        %v251 = vld [vmem:[%s210 + $0xf0] sm:$0xff]
        %v252 = vld [vmem:[%s210 + $0xf8] sm:$0xff]
        %v253 = vld [vmem:[%s210 + $0x100] sm:$0xff]
        %v254 = vld [vmem:[%s210 + $0x108] sm:$0xff]
        %v255 = vld [vmem:[%s210 + $0x110] sm:$0xff]
        %v256 = vld [vmem:[%s210 + $0x118] sm:$0xff]
        %v257 = vld [vmem:[%s210 + $0x120] sm:$0xff]
        %v258 = vld [vmem:[%s210 + $0x128] sm:$0xff]
        %v259 = vld [vmem:[%s210 + $0x130] sm:$0xff]
        %v260 = vld [vmem:[%s210 + $0x138] sm:$0xff]
        %v261 = vld [vmem:[%s210 + $0x140] sm:$0xff]
        %v262 = vld [vmem:[%s210 + $0x148] sm:$0xff]
        %v263 = vld [vmem:[%s210 + $0x150] sm:$0xff]
        %v264 = vld [vmem:[%s210 + $0x158] sm:$0xff]
        %v265 = vld [vmem:[%s210 + $0x160] sm:$0xff]
        %v266 = vld [vmem:[%s210 + $0x168] sm:$0xff]
        %v267 = vld [vmem:[%s210 + $0x170] sm:$0xff]
        %v268 = vld [vmem:[%s210 + $0x178] sm:$0xff]
        %v269 = vld [vmem:[%s210 + $0x180] sm:$0xff]
        %v270 = vld [vmem:[%s210 + $0x188] sm:$0xff]
        %v271 = vld [vmem:[%s210 + $0x190] sm:$0xff]
        %v272 = vld [vmem:[%s210 + $0x198] sm:$0xff]
        %v273 = vld [vmem:[%s210 + $0x1a0] sm:$0xff]
        %v274 = vld [vmem:[%s210 + $0x1a8] sm:$0xff]
        %v275 = vld [vmem:[%s210 + $0x1b0] sm:$0xff]
        %v276 = vld [vmem:[%s210 + $0x1b8] sm:$0xff]
        %v277 = vld [vmem:[%s210 + $0x1c0] sm:$0xff]
        %v278 = vld [vmem:[%s210 + $0x1c8] sm:$0xff]
        %v279 = vld [vmem:[%s210 + $0x1d0] sm:$0xff]
        %v280 = vld [vmem:[%s210 + $0x1d8] sm:$0xff]
        %v281 = vld [vmem:[%s210 + $0x1e0] sm:$0xff]
        %v282 = vld [vmem:[%s210 + $0x1e8] sm:$0xff]
        %v283 = vld [vmem:[%s210 + $0x1f0] sm:$0xff]
        %v284 = vld [vmem:[%s210 + $0x1f8] sm:$0xff]
        %v285 = vld [vmem:[%s215] sm:$0xf]
        %v286 = vld [vmem:[%s215 + $0x4] sm:$0xf]
        %v287 = vld [vmem:[%s215 + $0x8] sm:$0xf]
        %v288 = vld [vmem:[%s215 + $0xc] sm:$0xf]
        %v289 = vld [vmem:[%s215 + $0x10] sm:$0xf]
        %v290 = vld [vmem:[%s215 + $0x14] sm:$0xf]
        %v291 = vld [vmem:[%s215 + $0x18] sm:$0xf]
        %v292 = vld [vmem:[%s215 + $0x1c] sm:$0xf]
        %v293 = vld [vmem:[%s215 + $0x20] sm:$0xf]
        %v294 = vld [vmem:[%s215 + $0x24] sm:$0xf]
        %v295 = vld [vmem:[%s215 + $0x28] sm:$0xf]
        %v296 = vld [vmem:[%s215 + $0x2c] sm:$0xf]
        %v297 = vld [vmem:[%s215 + $0x30] sm:$0xf]
        %v298 = vld [vmem:[%s215 + $0x34] sm:$0xf]
        %v299 = vld [vmem:[%s215 + $0x38] sm:$0xf]
        %v300 = vld [vmem:[%s215 + $0x3c] sm:$0xf]
        %v301 = vld [vmem:[%s215 + $0x40] sm:$0xf]
        %v302 = vld [vmem:[%s215 + $0x44] sm:$0xf]
        %v303 = vld [vmem:[%s215 + $0x48] sm:$0x3]
        %v304 = vld [vmem:[%s218] sm:$0x1]
        %v306 = vlaneseq
        %v307 = vshrl.u32 %v306, 7
        %v308 = vsub.s32 0, %v307
        %v309 = vrot.slane %v304, %v308
        %v375 = vunpack.c.l.b16 %v221
        %v376 = vunpack.c.h.b16 %v221
        %v377 = vunpack.c.l.b16 %v222
        %v378 = vunpack.c.h.b16 %v222
        %v379 = vunpack.c.l.b16 %v223
        %v380 = vunpack.c.h.b16 %v223
        %v381 = vunpack.c.l.b16 %v224
        %v382 = vunpack.c.h.b16 %v224
        %v383 = vunpack.c.l.b16 %v225
        %v384 = vunpack.c.h.b16 %v225
        %v385 = vunpack.c.l.b16 %v226
        %v386 = vunpack.c.h.b16 %v226
        %v387 = vunpack.c.l.b16 %v227
        %v388 = vunpack.c.h.b16 %v227
        %v389 = vunpack.c.l.b16 %v228
        %v390 = vunpack.c.h.b16 %v228
        %v391 = vunpack.c.l.b16 %v229
        %v392 = vunpack.c.h.b16 %v229
        %v393 = vunpack.c.l.b16 %v230
        %v394 = vunpack.c.h.b16 %v230
        %v395 = vunpack.c.l.b16 %v231
        %v396 = vunpack.c.h.b16 %v231
        %v397 = vunpack.c.l.b16 %v232
        %v398 = vunpack.c.h.b16 %v232
        %v399 = vunpack.c.l.b16 %v233
        %v400 = vunpack.c.h.b16 %v233
        %v401 = vunpack.c.l.b16 %v234
        %v402 = vunpack.c.h.b16 %v234
        %v403 = vunpack.c.l.b16 %v235
        %v404 = vunpack.c.h.b16 %v235
        %v405 = vunpack.c.l.b16 %v236
        %v406 = vunpack.c.h.b16 %v236
        %v407 = vunpack.c.l.b16 %v237
        %v408 = vunpack.c.h.b16 %v237
        %v409 = vunpack.c.l.b16 %v238
        %v410 = vunpack.c.h.b16 %v238
        %v411 = vunpack.c.l.b16 %v239
        %v412 = vunpack.c.h.b16 %v239
        %v413 = vunpack.c.l.b16 %v240
        %v414 = vunpack.c.h.b16 %v240
        %v415 = vunpack.c.l.b16 %v241
        %v416 = vunpack.c.h.b16 %v241
        %v417 = vunpack.c.l.b16 %v242
        %v418 = vunpack.c.h.b16 %v242
        %v419 = vunpack.c.l.b16 %v243
        %v420 = vunpack.c.h.b16 %v243
        %v421 = vunpack.c.l.b16 %v244
        %v422 = vunpack.c.h.b16 %v244
        %v423 = vunpack.c.l.b16 %v245
        %v424 = vunpack.c.h.b16 %v245
        %v425 = vunpack.c.l.b16 %v246
        %v426 = vunpack.c.h.b16 %v246
        %v427 = vunpack.c.l.b16 %v247
        %v428 = vunpack.c.h.b16 %v247
        %v429 = vunpack.c.l.b16 %v248
        %v430 = vunpack.c.h.b16 %v248
        %v431 = vunpack.c.l.b16 %v249
        %v432 = vunpack.c.h.b16 %v249
        %v433 = vunpack.c.l.b16 %v250
        %v434 = vunpack.c.h.b16 %v250
        %v435 = vunpack.c.l.b16 %v251
        %v436 = vunpack.c.h.b16 %v251
        %v437 = vunpack.c.l.b16 %v252
        %v438 = vunpack.c.h.b16 %v252
        %v439 = vunpack.c.l.b16 %v253
        %v440 = vunpack.c.h.b16 %v253
        %v441 = vunpack.c.l.b16 %v254
        %v442 = vunpack.c.h.b16 %v254
        %v443 = vunpack.c.l.b16 %v255
        %v444 = vunpack.c.h.b16 %v255
        %v445 = vunpack.c.l.b16 %v256
        %v446 = vunpack.c.h.b16 %v256
        %v447 = vunpack.c.l.b16 %v257
        %v448 = vunpack.c.h.b16 %v257
        %v449 = vunpack.c.l.b16 %v258
        %v450 = vunpack.c.h.b16 %v258
        %v451 = vunpack.c.l.b16 %v259
        %v452 = vunpack.c.h.b16 %v259
        %v453 = vunpack.c.l.b16 %v260
        %v454 = vunpack.c.h.b16 %v260
        %v455 = vunpack.c.l.b16 %v261
        %v456 = vunpack.c.h.b16 %v261
        %v457 = vunpack.c.l.b16 %v262
        %v458 = vunpack.c.h.b16 %v262
        %v459 = vunpack.c.l.b16 %v263
        %v460 = vunpack.c.h.b16 %v263
        %v461 = vunpack.c.l.b16 %v264
        %v462 = vunpack.c.h.b16 %v264
        %v463 = vunpack.c.l.b16 %v265
        %v464 = vunpack.c.h.b16 %v265
        %v465 = vunpack.c.l.b16 %v266
        %v466 = vunpack.c.h.b16 %v266
        %v467 = vunpack.c.l.b16 %v267
        %v468 = vunpack.c.h.b16 %v267
        %v469 = vunpack.c.l.b16 %v268
        %v470 = vunpack.c.h.b16 %v268
        %v471 = vunpack.c.l.b16 %v269
        %v472 = vunpack.c.h.b16 %v269
        %v473 = vunpack.c.l.b16 %v270
        %v474 = vunpack.c.h.b16 %v270
        %v475 = vunpack.c.l.b16 %v271
        %v476 = vunpack.c.h.b16 %v271
        %v477 = vunpack.c.l.b16 %v272
        %v478 = vunpack.c.h.b16 %v272
        %v479 = vunpack.c.l.b16 %v273
        %v480 = vunpack.c.h.b16 %v273
        %v481 = vunpack.c.l.b16 %v274
        %v482 = vunpack.c.h.b16 %v274
        %v483 = vunpack.c.l.b16 %v275
        %v484 = vunpack.c.h.b16 %v275
        %v485 = vunpack.c.l.b16 %v276
        %v486 = vunpack.c.h.b16 %v276
        %v487 = vunpack.c.l.b16 %v277
        %v488 = vunpack.c.h.b16 %v277
        %v489 = vunpack.c.l.b16 %v278
        %v490 = vunpack.c.h.b16 %v278
        %v491 = vunpack.c.l.b16 %v279
        %v492 = vunpack.c.h.b16 %v279
        %v493 = vunpack.c.l.b16 %v280
        %v494 = vunpack.c.h.b16 %v280
        %v495 = vunpack.c.l.b16 %v281
        %v496 = vunpack.c.h.b16 %v281
        %v497 = vunpack.c.l.b16 %v282
        %v498 = vunpack.c.h.b16 %v282
        %v499 = vunpack.c.l.b16 %v283
        %v500 = vunpack.c.h.b16 %v283
        %v501 = vunpack.c.l.b16 %v284
        %v502 = vunpack.c.h.b16 %v284
        %v503 = vpack.c.b16 %v377, %v375
        %v504 = vpack.c.b16 %v378, %v376
        %v505 = vpack.c.b16 %v381, %v379
        %v506 = vpack.c.b16 %v382, %v380
        %v507 = vpack.c.b16 %v385, %v383
        %v508 = vpack.c.b16 %v386, %v384
        %v509 = vpack.c.b16 %v389, %v387
        %v510 = vpack.c.b16 %v390, %v388
        %v511 = vpack.c.b16 %v393, %v391
        %v512 = vpack.c.b16 %v394, %v392
        %v513 = vpack.c.b16 %v397, %v395
        %v514 = vpack.c.b16 %v398, %v396
        %v515 = vpack.c.b16 %v401, %v399
        %v516 = vpack.c.b16 %v402, %v400
        %v517 = vpack.c.b16 %v405, %v403
        %v518 = vpack.c.b16 %v406, %v404
        %v519 = vpack.c.b16 %v409, %v407
        %v520 = vpack.c.b16 %v410, %v408
        %v521 = vpack.c.b16 %v413, %v411
        %v522 = vpack.c.b16 %v414, %v412
        %v523 = vpack.c.b16 %v417, %v415
        %v524 = vpack.c.b16 %v418, %v416
        %v525 = vpack.c.b16 %v421, %v419
        %v526 = vpack.c.b16 %v422, %v420
        %v527 = vpack.c.b16 %v425, %v423
        %v528 = vpack.c.b16 %v426, %v424
        %v529 = vpack.c.b16 %v429, %v427
        %v530 = vpack.c.b16 %v430, %v428
        %v531 = vpack.c.b16 %v433, %v431
        %v532 = vpack.c.b16 %v434, %v432
        %v533 = vpack.c.b16 %v437, %v435
        %v534 = vpack.c.b16 %v438, %v436
        %v535 = vpack.c.b16 %v441, %v439
        %v536 = vpack.c.b16 %v442, %v440
        %v537 = vpack.c.b16 %v445, %v443
        %v538 = vpack.c.b16 %v446, %v444
        %v539 = vpack.c.b16 %v449, %v447
        %v540 = vpack.c.b16 %v450, %v448
        %v541 = vpack.c.b16 %v453, %v451
        %v542 = vpack.c.b16 %v454, %v452
        %v543 = vpack.c.b16 %v457, %v455
        %v544 = vpack.c.b16 %v458, %v456
        %v545 = vpack.c.b16 %v461, %v459
        %v546 = vpack.c.b16 %v462, %v460
        %v547 = vpack.c.b16 %v465, %v463
        %v548 = vpack.c.b16 %v466, %v464
        %v549 = vpack.c.b16 %v469, %v467
        %v550 = vpack.c.b16 %v470, %v468
        %v551 = vpack.c.b16 %v473, %v471
        %v552 = vpack.c.b16 %v474, %v472
        %v553 = vpack.c.b16 %v477, %v475
        %v554 = vpack.c.b16 %v478, %v476
        %v555 = vpack.c.b16 %v481, %v479
        %v556 = vpack.c.b16 %v482, %v480
        %v557 = vpack.c.b16 %v485, %v483
        %v558 = vpack.c.b16 %v486, %v484
        %v559 = vpack.c.b16 %v489, %v487
        %v560 = vpack.c.b16 %v490, %v488
        %v561 = vpack.c.b16 %v493, %v491
        %v562 = vpack.c.b16 %v494, %v492
        %v563 = vpack.c.b16 %v497, %v495
        %v564 = vpack.c.b16 %v498, %v496
        %v565 = vpack.c.b16 %v501, %v499
        %v566 = vpack.c.b16 %v502, %v500
        %v618 = vunpack.c.l.b16 %v285
        %v619 = vunpack.c.l.b16 %v286
        %v620 = vunpack.c.l.b16 %v287
        %v621 = vunpack.c.l.b16 %v288
        %v622 = vunpack.c.l.b16 %v289
        %v623 = vunpack.c.l.b16 %v290
        %v624 = vunpack.c.l.b16 %v291
        %v625 = vunpack.c.l.b16 %v292
        %v626 = vunpack.c.l.b16 %v293
        %v627 = vunpack.c.l.b16 %v294
        %v628 = vunpack.c.l.b16 %v295
        %v629 = vunpack.c.l.b16 %v296
        %v630 = vunpack.c.l.b16 %v297
        %v631 = vunpack.c.l.b16 %v298
        %v632 = vunpack.c.l.b16 %v299
        %v633 = vunpack.c.l.b16 %v300
        %v634 = vunpack.c.l.b16 %v301
        %v635 = vunpack.c.l.b16 %v302
        %v636 = vunpack.c.l.b16 %v303
        %v637 = vpack.c.b16 %v619, %v618
        %v638 = vpack.c.b16 %v621, %v620
        %v639 = vpack.c.b16 %v623, %v622
        %v640 = vpack.c.b16 %v625, %v624
        %v641 = vpack.c.b16 %v627, %v626
        %v642 = vpack.c.b16 %v629, %v628
        %v643 = vpack.c.b16 %v631, %v630
        %v644 = vpack.c.b16 %v633, %v632
        %v645 = vpack.c.b16 %v635, %v634
        %v646 = vpack.c.b16 %v636, %v636
        %vm656 = vcmask 154624
        %v658 = vsel %vm656, %v504, 0
        %v661 = vsel %vm656, %v506, 0
        %v664 = vsel %vm656, %v508, 0
        %v667 = vsel %vm656, %v510, 0
        %v670 = vsel %vm656, %v512, 0
        %v673 = vsel %vm656, %v514, 0
        %v676 = vsel %vm656, %v516, 0
        %v679 = vsel %vm656, %v518, 0
        %v682 = vsel %vm656, %v520, 0
        %v685 = vsel %vm656, %v522, 0
        %v688 = vsel %vm656, %v524, 0
        %v691 = vsel %vm656, %v526, 0
        %v694 = vsel %vm656, %v528, 0
        %v697 = vsel %vm656, %v530, 0
        %v700 = vsel %vm656, %v532, 0
        %v703 = vsel %vm656, %v534, 0
        %v706 = vsel %vm656, %v536, 0
        %v709 = vsel %vm656, %v538, 0
        %v712 = vsel %vm656, %v540, 0
        %v715 = vsel %vm656, %v542, 0
        %v718 = vsel %vm656, %v544, 0
        %v721 = vsel %vm656, %v546, 0
        %v724 = vsel %vm656, %v548, 0
        %v727 = vsel %vm656, %v550, 0
        %v730 = vsel %vm656, %v552, 0
        %v733 = vsel %vm656, %v554, 0
        %v736 = vsel %vm656, %v556, 0
        %v739 = vsel %vm656, %v558, 0
        %v742 = vsel %vm656, %v560, 0
        %v745 = vsel %vm656, %v562, 0
        %v748 = vsel %vm656, %v564, 0
        %v751 = vsel %vm656, %v566, 0
        %vm753 = vcmask 1040384
        %vm754 = vcmask 1041408
        %v755 = vsel %vm753, 4294967295, 65535
        %v756 = vsel %vm754, %v755, 0
        %v758 = vand.u32 %v646, %v756
        %760 = vmatprep.subr.bf16.mxu0 0
        %761 = vmatpush1.bf16.msra.mxu0 %v644
        %762 = vmatprep.subr.bf16.mxu0 0
        %763 = vmatpush1.bf16.msra.mxu0 %v643
        %764 = vmatprep.subr.bf16.mxu0 0
        %765 = vmatpush1.bf16.msra.mxu0 %v642
        %766 = vmatprep.subr.bf16.mxu0 0
        %767 = vmatpush1.bf16.msra.mxu0 %v641
        %768 = vmatprep.subr.bf16.mxu0 0
        %769 = vmatpush1.bf16.msra.mxu0 %v640
        %770 = vmatprep.subr.bf16.mxu0 0
        %771 = vmatpush1.bf16.msra.mxu0 %v639
        %772 = vmatprep.subr.bf16.mxu0 0
        %773 = vmatpush1.bf16.msra.mxu0 %v638
        %774 = vmatprep.subr.bf16.mxu0 0
        %775 = vmatpush1.bf16.msra.mxu0 %v637
        %776 = vmatprep.subr.bf16.mxu0 0
        %777 = vmatpush2.bf16.msra.mxu0 0
        %778 = vmatprep.subr.bf16.mxu0 0
        %779 = vmatpush2.bf16.msra.mxu0 0
        %780 = vmatprep.subr.bf16.mxu0 0
        %781 = vmatpush2.bf16.msra.mxu0 0
        %782 = vmatprep.subr.bf16.mxu0 0
        %783 = vmatpush2.bf16.msra.mxu0 0
        %784 = vmatprep.subr.bf16.mxu0 0
        %785 = vmatpush2.bf16.msra.mxu0 0
        %786 = vmatprep.subr.bf16.mxu0 0
        %787 = vmatpush2.bf16.msra.mxu0 0
        %788 = vmatprep.subr.bf16.mxu0 0
        %789 = vmatpush2.bf16.msra.mxu0 %v758
        %790 = vmatprep.subr.bf16.mxu0 0
        %791 = vmatpush2.bf16.msra.mxu0 %v645
        %792 = vmatprep.mubr.bf16.mxu0 %v658
        %793 = vmatmul.mubr.bf16.gmra.mxu0 %v503
        %v794 = vpop.f32.mrf.mxu0
        %v795 = vadd.f32 %v309, %v794
        %v796 = vpop.f32.mrf.mxu0
        %v797 = vpop.f32.mrf.mxu0
        %v798 = vadd.f32 %v309, %v797
        %v799 = vpop.f32.mrf.mxu0
        %800 = vmatprep.mubr.bf16.mxu0 %v661
        %801 = vmatmul.mubr.bf16.gmra.mxu0 %v505
        %v802 = vpop.f32.mrf.mxu0
        %v803 = vadd.f32 %v309, %v802
        %v804 = vpop.f32.mrf.mxu0
        %v805 = vpop.f32.mrf.mxu0
        %v806 = vadd.f32 %v309, %v805
        %v807 = vpop.f32.mrf.mxu0
        %808 = vmatprep.mubr.bf16.mxu0 %v664
        %809 = vmatmul.mubr.bf16.gmra.mxu0 %v507
        %v810 = vpop.f32.mrf.mxu0
        %v811 = vadd.f32 %v309, %v810
        %v812 = vpop.f32.mrf.mxu0
        %v813 = vpop.f32.mrf.mxu0
        %v814 = vadd.f32 %v309, %v813
        %v815 = vpop.f32.mrf.mxu0
        %816 = vmatprep.mubr.bf16.mxu0 %v667
        %817 = vmatmul.mubr.bf16.gmra.mxu0 %v509
        %v818 = vpop.f32.mrf.mxu0
        %v819 = vadd.f32 %v309, %v818
        %v820 = vpop.f32.mrf.mxu0
        %v821 = vpop.f32.mrf.mxu0
        %v822 = vadd.f32 %v309, %v821
        %v823 = vpop.f32.mrf.mxu0
        %824 = vmatprep.mubr.bf16.mxu0 %v670
        %825 = vmatmul.mubr.bf16.gmra.mxu0 %v511
        %v826 = vpop.f32.mrf.mxu0
        %v827 = vadd.f32 %v309, %v826
        %v828 = vpop.f32.mrf.mxu0
        %v829 = vpop.f32.mrf.mxu0
        %v830 = vadd.f32 %v309, %v829
        %v831 = vpop.f32.mrf.mxu0
        %832 = vmatprep.mubr.bf16.mxu0 %v673
        %833 = vmatmul.mubr.bf16.gmra.mxu0 %v513
        %v834 = vpop.f32.mrf.mxu0
        %v835 = vadd.f32 %v309, %v834
        %v836 = vpop.f32.mrf.mxu0
        %v837 = vpop.f32.mrf.mxu0
        %v838 = vadd.f32 %v309, %v837
        %v839 = vpop.f32.mrf.mxu0
        %840 = vmatprep.mubr.bf16.mxu0 %v676
        %841 = vmatmul.mubr.bf16.gmra.mxu0 %v515
        %v842 = vpop.f32.mrf.mxu0
        %v843 = vadd.f32 %v309, %v842
        %v844 = vpop.f32.mrf.mxu0
        %v845 = vpop.f32.mrf.mxu0
        %v846 = vadd.f32 %v309, %v845
        %v847 = vpop.f32.mrf.mxu0
        %848 = vmatprep.mubr.bf16.mxu0 %v679
        %849 = vmatmul.mubr.bf16.gmra.mxu0 %v517
        %v850 = vpop.f32.mrf.mxu0
        %v851 = vadd.f32 %v309, %v850
        %v852 = vpop.f32.mrf.mxu0
        %v853 = vpop.f32.mrf.mxu0
        %v854 = vadd.f32 %v309, %v853
        %v855 = vpop.f32.mrf.mxu0
        %856 = vmatprep.mubr.bf16.mxu0 %v682
        %857 = vmatmul.mubr.bf16.gmra.mxu0 %v519
        %v858 = vpop.f32.mrf.mxu0
        %v859 = vadd.f32 %v309, %v858
        %v860 = vpop.f32.mrf.mxu0
        %v861 = vpop.f32.mrf.mxu0
        %v862 = vadd.f32 %v309, %v861
        %v863 = vpop.f32.mrf.mxu0
        %864 = vmatprep.mubr.bf16.mxu0 %v685
        %865 = vmatmul.mubr.bf16.gmra.mxu0 %v521
        %v866 = vpop.f32.mrf.mxu0
        %v867 = vadd.f32 %v309, %v866
        %v868 = vpop.f32.mrf.mxu0
        %v869 = vpop.f32.mrf.mxu0
        %v870 = vadd.f32 %v309, %v869
        %v871 = vpop.f32.mrf.mxu0
        %872 = vmatprep.mubr.bf16.mxu0 %v688
        %873 = vmatmul.mubr.bf16.gmra.mxu0 %v523
        %v874 = vpop.f32.mrf.mxu0
        %v875 = vadd.f32 %v309, %v874
        %v876 = vpop.f32.mrf.mxu0
        %v877 = vpop.f32.mrf.mxu0
        %v878 = vadd.f32 %v309, %v877
        %v879 = vpop.f32.mrf.mxu0
        %880 = vmatprep.mubr.bf16.mxu0 %v691
        %881 = vmatmul.mubr.bf16.gmra.mxu0 %v525
        %v882 = vpop.f32.mrf.mxu0
        %v883 = vadd.f32 %v309, %v882
        %v884 = vpop.f32.mrf.mxu0
        %v885 = vpop.f32.mrf.mxu0
        %v886 = vadd.f32 %v309, %v885
        %v887 = vpop.f32.mrf.mxu0
        %888 = vmatprep.mubr.bf16.mxu0 %v694
        %889 = vmatmul.mubr.bf16.gmra.mxu0 %v527
        %v890 = vpop.f32.mrf.mxu0
        %v891 = vadd.f32 %v309, %v890
        %v892 = vpop.f32.mrf.mxu0
        %v893 = vpop.f32.mrf.mxu0
        %v894 = vadd.f32 %v309, %v893
        %v895 = vpop.f32.mrf.mxu0
        %896 = vmatprep.mubr.bf16.mxu0 %v697
        %897 = vmatmul.mubr.bf16.gmra.mxu0 %v529
        %v898 = vpop.f32.mrf.mxu0
        %v899 = vadd.f32 %v309, %v898
        %v900 = vpop.f32.mrf.mxu0
        %v901 = vpop.f32.mrf.mxu0
        %v902 = vadd.f32 %v309, %v901
        %v903 = vpop.f32.mrf.mxu0
        %904 = vmatprep.mubr.bf16.mxu0 %v700
        %905 = vmatmul.mubr.bf16.gmra.mxu0 %v531
        %v906 = vpop.f32.mrf.mxu0
        %v907 = vadd.f32 %v309, %v906
        %v908 = vpop.f32.mrf.mxu0
        %v909 = vpop.f32.mrf.mxu0
        %v910 = vadd.f32 %v309, %v909
        %v911 = vpop.f32.mrf.mxu0
        %912 = vmatprep.mubr.bf16.mxu0 %v703
        %913 = vmatmul.mubr.bf16.gmra.mxu0 %v533
        %v914 = vpop.f32.mrf.mxu0
        %v915 = vadd.f32 %v309, %v914
        %v916 = vpop.f32.mrf.mxu0
        %v917 = vpop.f32.mrf.mxu0
        %v918 = vadd.f32 %v309, %v917
        %v919 = vpop.f32.mrf.mxu0
        %920 = vmatprep.mubr.bf16.mxu0 %v706
        %921 = vmatmul.mubr.bf16.gmra.mxu0 %v535
        %v922 = vpop.f32.mrf.mxu0
        %v923 = vadd.f32 %v309, %v922
        %v924 = vpop.f32.mrf.mxu0
        %v925 = vpop.f32.mrf.mxu0
        %v926 = vadd.f32 %v309, %v925
        %v927 = vpop.f32.mrf.mxu0
        %928 = vmatprep.mubr.bf16.mxu0 %v709
        %929 = vmatmul.mubr.bf16.gmra.mxu0 %v537
        %v930 = vpop.f32.mrf.mxu0
        %v931 = vadd.f32 %v309, %v930
        %v932 = vpop.f32.mrf.mxu0
        %v933 = vpop.f32.mrf.mxu0
        %v934 = vadd.f32 %v309, %v933
        %v935 = vpop.f32.mrf.mxu0
        %936 = vmatprep.mubr.bf16.mxu0 %v712
        %937 = vmatmul.mubr.bf16.gmra.mxu0 %v539
        %v938 = vpop.f32.mrf.mxu0
        %v939 = vadd.f32 %v309, %v938
        %v940 = vpop.f32.mrf.mxu0
        %v941 = vpop.f32.mrf.mxu0
        %v942 = vadd.f32 %v309, %v941
        %v943 = vpop.f32.mrf.mxu0
        %944 = vmatprep.mubr.bf16.mxu0 %v715
        %945 = vmatmul.mubr.bf16.gmra.mxu0 %v541
        %v946 = vpop.f32.mrf.mxu0
        %v947 = vadd.f32 %v309, %v946
        %v948 = vpop.f32.mrf.mxu0
        %v949 = vpop.f32.mrf.mxu0
        %v950 = vadd.f32 %v309, %v949
        %v951 = vpop.f32.mrf.mxu0
        %952 = vmatprep.mubr.bf16.mxu0 %v718
        %953 = vmatmul.mubr.bf16.gmra.mxu0 %v543
        %v954 = vpop.f32.mrf.mxu0
        %v955 = vadd.f32 %v309, %v954
        %v956 = vpop.f32.mrf.mxu0
        %v957 = vpop.f32.mrf.mxu0
        %v958 = vadd.f32 %v309, %v957
        %v959 = vpop.f32.mrf.mxu0
        %960 = vmatprep.mubr.bf16.mxu0 %v721
        %961 = vmatmul.mubr.bf16.gmra.mxu0 %v545
        %v962 = vpop.f32.mrf.mxu0
        %v963 = vadd.f32 %v309, %v962
        %v964 = vpop.f32.mrf.mxu0
        %v965 = vpop.f32.mrf.mxu0
        %v966 = vadd.f32 %v309, %v965
        %v967 = vpop.f32.mrf.mxu0
        %968 = vmatprep.mubr.bf16.mxu0 %v724
        %969 = vmatmul.mubr.bf16.gmra.mxu0 %v547
        %v970 = vpop.f32.mrf.mxu0
        %v971 = vadd.f32 %v309, %v970
        %v972 = vpop.f32.mrf.mxu0
        %v973 = vpop.f32.mrf.mxu0
        %v974 = vadd.f32 %v309, %v973
        %v975 = vpop.f32.mrf.mxu0
        %976 = vmatprep.mubr.bf16.mxu0 %v727
        %977 = vmatmul.mubr.bf16.gmra.mxu0 %v549
        %v978 = vpop.f32.mrf.mxu0
        %v979 = vadd.f32 %v309, %v978
        %v980 = vpop.f32.mrf.mxu0
        %v981 = vpop.f32.mrf.mxu0
        %v982 = vadd.f32 %v309, %v981
        %v983 = vpop.f32.mrf.mxu0
        %984 = vmatprep.mubr.bf16.mxu0 %v730
        %985 = vmatmul.mubr.bf16.gmra.mxu0 %v551
        %v986 = vpop.f32.mrf.mxu0
        %v987 = vadd.f32 %v309, %v986
        %v988 = vpop.f32.mrf.mxu0
        %v989 = vpop.f32.mrf.mxu0
        %v990 = vadd.f32 %v309, %v989
        %v991 = vpop.f32.mrf.mxu0
        %992 = vmatprep.mubr.bf16.mxu0 %v733
        %993 = vmatmul.mubr.bf16.gmra.mxu0 %v553
        %v994 = vpop.f32.mrf.mxu0
        %v995 = vadd.f32 %v309, %v994
        %v996 = vpop.f32.mrf.mxu0
        %v997 = vpop.f32.mrf.mxu0
        %v998 = vadd.f32 %v309, %v997
        %v999 = vpop.f32.mrf.mxu0
        %1000 = vmatprep.mubr.bf16.mxu0 %v736
        %1001 = vmatmul.mubr.bf16.gmra.mxu0 %v555
        %v1002 = vpop.f32.mrf.mxu0
        %v1003 = vadd.f32 %v309, %v1002
        %v1004 = vpop.f32.mrf.mxu0
        %v1005 = vpop.f32.mrf.mxu0
        %v1006 = vadd.f32 %v309, %v1005
        %v1007 = vpop.f32.mrf.mxu0
        %1008 = vmatprep.mubr.bf16.mxu0 %v739
        %1009 = vmatmul.mubr.bf16.gmra.mxu0 %v557
        %v1010 = vpop.f32.mrf.mxu0
        %v1011 = vadd.f32 %v309, %v1010
        %v1012 = vpop.f32.mrf.mxu0
        %v1013 = vpop.f32.mrf.mxu0
        %v1014 = vadd.f32 %v309, %v1013
        %v1015 = vpop.f32.mrf.mxu0
        %1016 = vmatprep.mubr.bf16.mxu0 %v742
        %1017 = vmatmul.mubr.bf16.gmra.mxu0 %v559
        %v1018 = vpop.f32.mrf.mxu0
        %v1019 = vadd.f32 %v309, %v1018
        %v1020 = vpop.f32.mrf.mxu0
        %v1021 = vpop.f32.mrf.mxu0
        %v1022 = vadd.f32 %v309, %v1021
        %v1023 = vpop.f32.mrf.mxu0
        %1024 = vmatprep.mubr.bf16.mxu0 %v745
        %1025 = vmatmul.mubr.bf16.gmra.mxu0 %v561
        %v1026 = vpop.f32.mrf.mxu0
        %v1027 = vadd.f32 %v309, %v1026
        %v1028 = vpop.f32.mrf.mxu0
        %v1029 = vpop.f32.mrf.mxu0
        %v1030 = vadd.f32 %v309, %v1029
        %v1031 = vpop.f32.mrf.mxu0
        %1032 = vmatprep.mubr.bf16.mxu0 %v748
        %1033 = vmatmul.mubr.bf16.gmra.mxu0 %v563
        %v1034 = vpop.f32.mrf.mxu0
        %v1035 = vadd.f32 %v309, %v1034
        %v1036 = vpop.f32.mrf.mxu0
        %v1037 = vpop.f32.mrf.mxu0
        %v1038 = vadd.f32 %v309, %v1037
        %v1039 = vpop.f32.mrf.mxu0
        %1040 = vmatprep.mubr.bf16.mxu0 %v751
        %1041 = vmatmul.mubr.bf16.gmra.mxu0 %v565
        %v1042 = vpop.f32.mrf.mxu0
        %v1043 = vadd.f32 %v309, %v1042
        %v1044 = vpop.f32.mrf.mxu0
        %v1045 = vpop.f32.mrf.mxu0
        %v1046 = vadd.f32 %v309, %v1045
        %v1047 = vpop.f32.mrf.mxu0
        %1048 = vdwg.mxu0
        %v1049 = vmax.f32 %v795, 0.0
        %v1050 = vmax.f32 %v798, 0.0
        %v1051 = vmax.f32 %v803, 0.0
        %v1052 = vmax.f32 %v806, 0.0
        %v1053 = vmax.f32 %v811, 0.0
        %v1054 = vmax.f32 %v814, 0.0
        %v1055 = vmax.f32 %v819, 0.0
        %v1056 = vmax.f32 %v822, 0.0
        %v1057 = vmax.f32 %v827, 0.0
        %v1058 = vmax.f32 %v830, 0.0
        %v1059 = vmax.f32 %v835, 0.0
        %v1060 = vmax.f32 %v838, 0.0
        %v1061 = vmax.f32 %v843, 0.0
        %v1062 = vmax.f32 %v846, 0.0
        %v1063 = vmax.f32 %v851, 0.0
        %v1064 = vmax.f32 %v854, 0.0
        %v1065 = vmax.f32 %v859, 0.0
        %v1066 = vmax.f32 %v862, 0.0
        %v1067 = vmax.f32 %v867, 0.0
        %v1068 = vmax.f32 %v870, 0.0
        %v1069 = vmax.f32 %v875, 0.0
        %v1070 = vmax.f32 %v878, 0.0
        %v1071 = vmax.f32 %v883, 0.0
        %v1072 = vmax.f32 %v886, 0.0
        %v1073 = vmax.f32 %v891, 0.0
        %v1074 = vmax.f32 %v894, 0.0
        %v1075 = vmax.f32 %v899, 0.0
        %v1076 = vmax.f32 %v902, 0.0
        %v1077 = vmax.f32 %v907, 0.0
        %v1078 = vmax.f32 %v910, 0.0
        %v1079 = vmax.f32 %v915, 0.0
        %v1080 = vmax.f32 %v918, 0.0
        %v1081 = vmax.f32 %v923, 0.0
        %v1082 = vmax.f32 %v926, 0.0
        %v1083 = vmax.f32 %v931, 0.0
        %v1084 = vmax.f32 %v934, 0.0
        %v1085 = vmax.f32 %v939, 0.0
        %v1086 = vmax.f32 %v942, 0.0
        %v1087 = vmax.f32 %v947, 0.0
        %v1088 = vmax.f32 %v950, 0.0
        %v1089 = vmax.f32 %v955, 0.0
        %v1090 = vmax.f32 %v958, 0.0
        %v1091 = vmax.f32 %v963, 0.0
        %v1092 = vmax.f32 %v966, 0.0
        %v1093 = vmax.f32 %v971, 0.0
        %v1094 = vmax.f32 %v974, 0.0
        %v1095 = vmax.f32 %v979, 0.0
        %v1096 = vmax.f32 %v982, 0.0
        %v1097 = vmax.f32 %v987, 0.0
        %v1098 = vmax.f32 %v990, 0.0
        %v1099 = vmax.f32 %v995, 0.0
        %v1100 = vmax.f32 %v998, 0.0
        %v1101 = vmax.f32 %v1003, 0.0
        %v1102 = vmax.f32 %v1006, 0.0
        %v1103 = vmax.f32 %v1011, 0.0
        %v1104 = vmax.f32 %v1014, 0.0
        %v1105 = vmax.f32 %v1019, 0.0
        %v1106 = vmax.f32 %v1022, 0.0
        %v1107 = vmax.f32 %v1027, 0.0
        %v1108 = vmax.f32 %v1030, 0.0
        %v1109 = vmax.f32 %v1035, 0.0
        %v1110 = vmax.f32 %v1038, 0.0
        %v1111 = vmax.f32 %v1043, 0.0
        %v1112 = vmax.f32 %v1046, 0.0
        %v1113 = vpack.c.bf16 %v1050, %v1049
        %v1114 = vpack.c.bf16 %v1052, %v1051
        %v1115 = vpack.c.bf16 %v1054, %v1053
        %v1116 = vpack.c.bf16 %v1056, %v1055
        %v1117 = vpack.c.bf16 %v1058, %v1057
        %v1118 = vpack.c.bf16 %v1060, %v1059
        %v1119 = vpack.c.bf16 %v1062, %v1061
        %v1120 = vpack.c.bf16 %v1064, %v1063
        %v1121 = vpack.c.bf16 %v1066, %v1065
        %v1122 = vpack.c.bf16 %v1068, %v1067
        %v1123 = vpack.c.bf16 %v1070, %v1069
        %v1124 = vpack.c.bf16 %v1072, %v1071
        %v1125 = vpack.c.bf16 %v1074, %v1073
        %v1126 = vpack.c.bf16 %v1076, %v1075
        %v1127 = vpack.c.bf16 %v1078, %v1077
        %v1128 = vpack.c.bf16 %v1080, %v1079
        %v1129 = vpack.c.bf16 %v1082, %v1081
        %v1130 = vpack.c.bf16 %v1084, %v1083
        %v1131 = vpack.c.bf16 %v1086, %v1085
        %v1132 = vpack.c.bf16 %v1088, %v1087
        %v1133 = vpack.c.bf16 %v1090, %v1089
        %v1134 = vpack.c.bf16 %v1092, %v1091
        %v1135 = vpack.c.bf16 %v1094, %v1093
        %v1136 = vpack.c.bf16 %v1096, %v1095
        %v1137 = vpack.c.bf16 %v1098, %v1097
        %v1138 = vpack.c.bf16 %v1100, %v1099
        %v1139 = vpack.c.bf16 %v1102, %v1101
        %v1140 = vpack.c.bf16 %v1104, %v1103
        %v1141 = vpack.c.bf16 %v1106, %v1105
        %v1142 = vpack.c.bf16 %v1108, %v1107
        %v1143 = vpack.c.bf16 %v1110, %v1109
        %v1144 = vpack.c.bf16 %v1112, %v1111
        %v1177 = vunpack.c.l.b16 %v1113
        %v1178 = vunpack.c.h.b16 %v1113
        %v1179 = vunpack.c.l.b16 %v1114
        %v1180 = vunpack.c.h.b16 %v1114
        %v1181 = vunpack.c.l.b16 %v1115
        %v1182 = vunpack.c.h.b16 %v1115
        %v1183 = vunpack.c.l.b16 %v1116
        %v1184 = vunpack.c.h.b16 %v1116
        %v1185 = vunpack.c.l.b16 %v1117
        %v1186 = vunpack.c.h.b16 %v1117
        %v1187 = vunpack.c.l.b16 %v1118
        %v1188 = vunpack.c.h.b16 %v1118
        %v1189 = vunpack.c.l.b16 %v1119
        %v1190 = vunpack.c.h.b16 %v1119
        %v1191 = vunpack.c.l.b16 %v1120
        %v1192 = vunpack.c.h.b16 %v1120
        %v1193 = vunpack.c.l.b16 %v1121
        %v1194 = vunpack.c.h.b16 %v1121
        %v1195 = vunpack.c.l.b16 %v1122
        %v1196 = vunpack.c.h.b16 %v1122
        %v1197 = vunpack.c.l.b16 %v1123
        %v1198 = vunpack.c.h.b16 %v1123
        %v1199 = vunpack.c.l.b16 %v1124
        %v1200 = vunpack.c.h.b16 %v1124
        %v1201 = vunpack.c.l.b16 %v1125
        %v1202 = vunpack.c.h.b16 %v1125
        %v1203 = vunpack.c.l.b16 %v1126
        %v1204 = vunpack.c.h.b16 %v1126
        %v1205 = vunpack.c.l.b16 %v1127
        %v1206 = vunpack.c.h.b16 %v1127
        %v1207 = vunpack.c.l.b16 %v1128
        %v1208 = vunpack.c.h.b16 %v1128
        %v1209 = vunpack.c.l.b16 %v1129
        %v1210 = vunpack.c.h.b16 %v1129
        %v1211 = vunpack.c.l.b16 %v1130
        %v1212 = vunpack.c.h.b16 %v1130
        %v1213 = vunpack.c.l.b16 %v1131
        %v1214 = vunpack.c.h.b16 %v1131
        %v1215 = vunpack.c.l.b16 %v1132
        %v1216 = vunpack.c.h.b16 %v1132
        %v1217 = vunpack.c.l.b16 %v1133
        %v1218 = vunpack.c.h.b16 %v1133
        %v1219 = vunpack.c.l.b16 %v1134
        %v1220 = vunpack.c.h.b16 %v1134
        %v1221 = vunpack.c.l.b16 %v1135
        %v1222 = vunpack.c.h.b16 %v1135
        %v1223 = vunpack.c.l.b16 %v1136
        %v1224 = vunpack.c.h.b16 %v1136
        %v1225 = vunpack.c.l.b16 %v1137
        %v1226 = vunpack.c.h.b16 %v1137
        %v1227 = vunpack.c.l.b16 %v1138
        %v1228 = vunpack.c.h.b16 %v1138
        %v1229 = vunpack.c.l.b16 %v1139
        %v1230 = vunpack.c.h.b16 %v1139
        %v1231 = vunpack.c.l.b16 %v1140
        %v1232 = vunpack.c.h.b16 %v1140
        %v1233 = vunpack.c.l.b16 %v1141
        %v1234 = vunpack.c.h.b16 %v1141
        %v1235 = vunpack.c.l.b16 %v1142
        %v1236 = vunpack.c.h.b16 %v1142
        %v1237 = vunpack.c.l.b16 %v1143
        %v1238 = vunpack.c.h.b16 %v1143
        %v1239 = vunpack.c.l.b16 %v1144
        %v1240 = vunpack.c.h.b16 %v1144
        %v1241 = vpack.c.b16 %v1177, %v1177
        %v1242 = vpack.c.b16 %v1178, %v1178
        %v1243 = vpack.c.b16 %v1179, %v1179
        %v1244 = vpack.c.b16 %v1180, %v1180
        %v1245 = vpack.c.b16 %v1181, %v1181
        %v1246 = vpack.c.b16 %v1182, %v1182
        %v1247 = vpack.c.b16 %v1183, %v1183
        %v1248 = vpack.c.b16 %v1184, %v1184
        %v1249 = vpack.c.b16 %v1185, %v1185
        %v1250 = vpack.c.b16 %v1186, %v1186
        %v1251 = vpack.c.b16 %v1187, %v1187
        %v1252 = vpack.c.b16 %v1188, %v1188
        %v1253 = vpack.c.b16 %v1189, %v1189
        %v1254 = vpack.c.b16 %v1190, %v1190
        %v1255 = vpack.c.b16 %v1191, %v1191
        %v1256 = vpack.c.b16 %v1192, %v1192
        %v1257 = vpack.c.b16 %v1193, %v1193
        %v1258 = vpack.c.b16 %v1194, %v1194
        %v1259 = vpack.c.b16 %v1195, %v1195
        %v1260 = vpack.c.b16 %v1196, %v1196
        %v1261 = vpack.c.b16 %v1197, %v1197
        %v1262 = vpack.c.b16 %v1198, %v1198
        %v1263 = vpack.c.b16 %v1199, %v1199
        %v1264 = vpack.c.b16 %v1200, %v1200
        %v1265 = vpack.c.b16 %v1201, %v1201
        %v1266 = vpack.c.b16 %v1202, %v1202
        %v1267 = vpack.c.b16 %v1203, %v1203
        %v1268 = vpack.c.b16 %v1204, %v1204
        %v1269 = vpack.c.b16 %v1205, %v1205
        %v1270 = vpack.c.b16 %v1206, %v1206
        %v1271 = vpack.c.b16 %v1207, %v1207
        %v1272 = vpack.c.b16 %v1208, %v1208
        %v1273 = vpack.c.b16 %v1209, %v1209
        %v1274 = vpack.c.b16 %v1210, %v1210
        %v1275 = vpack.c.b16 %v1211, %v1211
        %v1276 = vpack.c.b16 %v1212, %v1212
        %v1277 = vpack.c.b16 %v1213, %v1213
        %v1278 = vpack.c.b16 %v1214, %v1214
        %v1279 = vpack.c.b16 %v1215, %v1215
        %v1280 = vpack.c.b16 %v1216, %v1216
        %v1281 = vpack.c.b16 %v1217, %v1217
        %v1282 = vpack.c.b16 %v1218, %v1218
        %v1283 = vpack.c.b16 %v1219, %v1219
        %v1284 = vpack.c.b16 %v1220, %v1220
        %v1285 = vpack.c.b16 %v1221, %v1221
        %v1286 = vpack.c.b16 %v1222, %v1222
        %v1287 = vpack.c.b16 %v1223, %v1223
        %v1288 = vpack.c.b16 %v1224, %v1224
        %v1289 = vpack.c.b16 %v1225, %v1225
        %v1290 = vpack.c.b16 %v1226, %v1226
        %v1291 = vpack.c.b16 %v1227, %v1227
        %v1292 = vpack.c.b16 %v1228, %v1228
        %v1293 = vpack.c.b16 %v1229, %v1229
        %v1294 = vpack.c.b16 %v1230, %v1230
        %v1295 = vpack.c.b16 %v1231, %v1231
        %v1296 = vpack.c.b16 %v1232, %v1232
        %v1297 = vpack.c.b16 %v1233, %v1233
        %v1298 = vpack.c.b16 %v1234, %v1234
        %v1299 = vpack.c.b16 %v1235, %v1235
        %v1300 = vpack.c.b16 %v1236, %v1236
        %v1301 = vpack.c.b16 %v1237, %v1237
        %v1302 = vpack.c.b16 %v1238, %v1238
        %v1303 = vpack.c.b16 %v1239, %v1239
        %v1304 = vpack.c.b16 %v1240, %v1240
        %vm1369 = vcmask 519168
        %1370 = vst.msk [vmem:[%s204] sm:$0xf] %vm1369, %v1241
        %1371 = vst.msk [vmem:[%s204 + $0x4] sm:$0xf] %vm1369, %v1242
        %1372 = vst.msk [vmem:[%s204 + $0x8] sm:$0xf] %vm1369, %v1243
        %1373 = vst.msk [vmem:[%s204 + $0xc] sm:$0xf] %vm1369, %v1244
        %1374 = vst.msk [vmem:[%s204 + $0x10] sm:$0xf] %vm1369, %v1245
        %1375 = vst.msk [vmem:[%s204 + $0x14] sm:$0xf] %vm1369, %v1246
        %1376 = vst.msk [vmem:[%s204 + $0x18] sm:$0xf] %vm1369, %v1247
        %1377 = vst.msk [vmem:[%s204 + $0x1c] sm:$0xf] %vm1369, %v1248
        %1378 = vst.msk [vmem:[%s204 + $0x20] sm:$0xf] %vm1369, %v1249
        %1379 = vst.msk [vmem:[%s204 + $0x24] sm:$0xf] %vm1369, %v1250
        %1380 = vst.msk [vmem:[%s204 + $0x28] sm:$0xf] %vm1369, %v1251
        %1381 = vst.msk [vmem:[%s204 + $0x2c] sm:$0xf] %vm1369, %v1252
        %1382 = vst.msk [vmem:[%s204 + $0x30] sm:$0xf] %vm1369, %v1253
        %1383 = vst.msk [vmem:[%s204 + $0x34] sm:$0xf] %vm1369, %v1254
        %1384 = vst.msk [vmem:[%s204 + $0x38] sm:$0xf] %vm1369, %v1255
        %1385 = vst.msk [vmem:[%s204 + $0x3c] sm:$0xf] %vm1369, %v1256
        %1386 = vst.msk [vmem:[%s204 + $0x40] sm:$0xf] %vm1369, %v1257
        %1387 = vst.msk [vmem:[%s204 + $0x44] sm:$0xf] %vm1369, %v1258
        %1388 = vst.msk [vmem:[%s204 + $0x48] sm:$0xf] %vm1369, %v1259
        %1389 = vst.msk [vmem:[%s204 + $0x4c] sm:$0xf] %vm1369, %v1260
        %1390 = vst.msk [vmem:[%s204 + $0x50] sm:$0xf] %vm1369, %v1261
        %1391 = vst.msk [vmem:[%s204 + $0x54] sm:$0xf] %vm1369, %v1262
        %1392 = vst.msk [vmem:[%s204 + $0x58] sm:$0xf] %vm1369, %v1263
        %1393 = vst.msk [vmem:[%s204 + $0x5c] sm:$0xf] %vm1369, %v1264
        %1394 = vst.msk [vmem:[%s204 + $0x60] sm:$0xf] %vm1369, %v1265
        %1395 = vst.msk [vmem:[%s204 + $0x64] sm:$0xf] %vm1369, %v1266
        %1396 = vst.msk [vmem:[%s204 + $0x68] sm:$0xf] %vm1369, %v1267
        %1397 = vst.msk [vmem:[%s204 + $0x6c] sm:$0xf] %vm1369, %v1268
        %1398 = vst.msk [vmem:[%s204 + $0x70] sm:$0xf] %vm1369, %v1269
        %1399 = vst.msk [vmem:[%s204 + $0x74] sm:$0xf] %vm1369, %v1270
        %1400 = vst.msk [vmem:[%s204 + $0x78] sm:$0xf] %vm1369, %v1271
        %1401 = vst.msk [vmem:[%s204 + $0x7c] sm:$0xf] %vm1369, %v1272
        %1402 = vst.msk [vmem:[%s204 + $0x80] sm:$0xf] %vm1369, %v1273
        %1403 = vst.msk [vmem:[%s204 + $0x84] sm:$0xf] %vm1369, %v1274
        %1404 = vst.msk [vmem:[%s204 + $0x88] sm:$0xf] %vm1369, %v1275
        %1405 = vst.msk [vmem:[%s204 + $0x8c] sm:$0xf] %vm1369, %v1276
        %1406 = vst.msk [vmem:[%s204 + $0x90] sm:$0xf] %vm1369, %v1277
        %1407 = vst.msk [vmem:[%s204 + $0x94] sm:$0xf] %vm1369, %v1278
        %1408 = vst.msk [vmem:[%s204 + $0x98] sm:$0xf] %vm1369, %v1279
        %1409 = vst.msk [vmem:[%s204 + $0x9c] sm:$0xf] %vm1369, %v1280
        %1410 = vst.msk [vmem:[%s204 + $0xa0] sm:$0xf] %vm1369, %v1281
        %1411 = vst.msk [vmem:[%s204 + $0xa4] sm:$0xf] %vm1369, %v1282
        %1412 = vst.msk [vmem:[%s204 + $0xa8] sm:$0xf] %vm1369, %v1283
        %1413 = vst.msk [vmem:[%s204 + $0xac] sm:$0xf] %vm1369, %v1284
        %1414 = vst.msk [vmem:[%s204 + $0xb0] sm:$0xf] %vm1369, %v1285
        %1415 = vst.msk [vmem:[%s204 + $0xb4] sm:$0xf] %vm1369, %v1286
        %1416 = vst.msk [vmem:[%s204 + $0xb8] sm:$0xf] %vm1369, %v1287
        %1417 = vst.msk [vmem:[%s204 + $0xbc] sm:$0xf] %vm1369, %v1288
        %1418 = vst.msk [vmem:[%s204 + $0xc0] sm:$0xf] %vm1369, %v1289
        %1419 = vst.msk [vmem:[%s204 + $0xc4] sm:$0xf] %vm1369, %v1290
        %1420 = vst.msk [vmem:[%s204 + $0xc8] sm:$0xf] %vm1369, %v1291
        %1421 = vst.msk [vmem:[%s204 + $0xcc] sm:$0xf] %vm1369, %v1292
        %1422 = vst.msk [vmem:[%s204 + $0xd0] sm:$0xf] %vm1369, %v1293
        %1423 = vst.msk [vmem:[%s204 + $0xd4] sm:$0xf] %vm1369, %v1294
        %1424 = vst.msk [vmem:[%s204 + $0xd8] sm:$0xf] %vm1369, %v1295
        %1425 = vst.msk [vmem:[%s204 + $0xdc] sm:$0xf] %vm1369, %v1296
        %1426 = vst.msk [vmem:[%s204 + $0xe0] sm:$0xf] %vm1369, %v1297
        %1427 = vst.msk [vmem:[%s204 + $0xe4] sm:$0xf] %vm1369, %v1298
        %1428 = vst.msk [vmem:[%s204 + $0xe8] sm:$0xf] %vm1369, %v1299
        %1429 = vst.msk [vmem:[%s204 + $0xec] sm:$0xf] %vm1369, %v1300
        %1430 = vst.msk [vmem:[%s204 + $0xf0] sm:$0xf] %vm1369, %v1301
        %1431 = vst.msk [vmem:[%s204 + $0xf4] sm:$0xf] %vm1369, %v1302
        %1432 = vst.msk [vmem:[%s204 + $0xf8] sm:$0xf] %vm1369, %v1303
        %1433 = vst.msk [vmem:[%s204 + $0xfc] sm:$0xf] %vm1369, %v1304
        %s1434 = sand.u32 %s117, 1
        %s1435 = scalar_lea.sflag [#allocation3], %s1434
        %s1436 = sand.u32 %s117, 1
        %s1437 = smul.addr %s1436, 256
        %s1438 = scalar_lea.vmem [#allocation2], %s1437
        // Predicated region
        $region33: #{conv_generic.1} parent=31 // pred_check
          %p1439 = pneg %p127
        $region34: #{conv_generic.1} parent=31 // pred_check_branch
          %1441 = sbr.rel (%p1439) target = $region36
        $region35: #{conv_generic.1} parent=31 // pred_region
          %s1442 = smul.u32 64, %s21
          %s1444 = ssub.s32 4096, 4096
          %1445 = vsyncadd %s1435, %s1444
          %s1446 = sadd.s32 %s22, %s1442
          %s1447 = smul.addr %s1446, 64
          %s1448 = scalar_lea.hbm %s3, %s1447
          %s1449 = sshll.u32 %s1438, 4
          %s1450 = int_to_ptr.vmem [resolvable:$true] %s1449
          %1455 = dma.vmem_to_hbm [thread:$0]  %s1450, 4096, %s1448, %s1435, 64, 64, 4
        $region36: #{conv_generic.1} parent=31 // pred_fallthru
          _
      $region32: #{conv_generic.1} parent=5 // pred_fallthru
        _
      %p1456 = scmp.le.s32.totalorder 2, %s12
      // Predicated region
      $region37: #{conv_generic.1} parent=5 // pred_check
        %p1457 = pneg %p1456
      $region38: #{conv_generic.1} parent=5 // pred_check_branch
        %1459 = sbr.rel (%p1457) target = $region40
      $region39: #{conv_generic.1} parent=5 // pred_region
        %s1460 = ssub.s32 %s12, 2
        // Predicated region
        $region41: #{conv_generic.1} parent=39 // pred_check
          %p1461 = pneg %p133
        $region42: #{conv_generic.1} parent=39 // pred_check_branch
          %1463 = sbr.rel (%p1461) target = $region44
        $region43: #{conv_generic.1} parent=39 // pred_region
          %s1464 = sand.u32 %s118, 1
          %s1465 = scalar_lea.sflag [#allocation3], %s1464
          %s1466 = sand.u32 %s118, 1
          %s1467 = smul.addr %s1466, 256
          %s1468 = scalar_lea.vmem [#allocation2], %s1467
          %1469 = dma.done %s1465, 4096
        $region44: #{conv_generic.1} parent=39 // pred_fallthru
          _
      $region40: #{conv_generic.1} parent=5 // pred_fallthru
        _
    $region6: #{conv_generic.1} parent=1 // loop_footer
      %s16 = sadd.s32 1, %s12
    $region7: #{conv_generic.1} parent=1 // loop_footer_branch
      %11 = sbr.rel target = $region3
    $region8: #{conv_generic.1} parent=1 // loop_exit
      _
    %1470 = vsyncpa [#allocation3], 1
    %s1471 = scalar_lea.sflag [#allocation3], 1
    %1472 = vsyncpa %s1471, 1

</llo_original>
